<compile_context>
chip_gen: v7x
topology: tpu7x:2x2x1
jax: 0.10.0
libtpu: 0.0.40
codegen_flags: <defaults>
</compile_context>

<pallas_src>
import jax
import jax.numpy as jnp
from jax.experimental import pallas as pl
from jax.experimental.pallas import tpu as pltpu

# Drives padded class columns to exp() == 0 in softmax. finfo-derived (and
# halved) so it stays finite in f32 even after the row-max subtraction.
_PAD_BIAS = float(jnp.finfo(jnp.float32).min) * 0.5

# Beyond this many rows, prefer the batch-tiled grid path (>=2 steps) so that
# on v7x both TensorCores get work instead of one core doing everything.
_GRIDLESS_MAX_ROWS = 128


def mlp_kernel(x_ref, w1_ref, b1_ref, w2_ref, b2_ref, o_ref):
    # Hidden layer: cast x to bf16 in-kernel, MXU matmul with f32 accumulation,
    # f32 bias add + ReLU.
    x_bf = x_ref[...].astype(jnp.bfloat16)
    h = jnp.dot(x_bf, w1_ref[...], preferred_element_type=jnp.float32)
    h = jnp.maximum(h + b1_ref[...], 0.0)                       # (R, H) + (1, H)

    # Output layer: bf16 operands again; padded class columns carry a huge
    # negative bias so they contribute nothing to the softmax denominator.
    logits = jnp.dot(h.astype(jnp.bfloat16), w2_ref[...],
                     preferred_element_type=jnp.float32)
    logits = logits + b2_ref[...]                               # (R, Op) + (1, Op)

    # Numerically stable softmax over the lane-dense class axis. Exact divide:
    # denom is a (R, 1) column, so this costs nothing next to the matmuls and
    # keeps sum(probs) == 1 to f32 rounding.
    m = jnp.max(logits, axis=1, keepdims=True)
    e = jnp.exp(logits - m)
    denom = jnp.sum(e, axis=1, keepdims=True)
    o_ref[...] = (e / denom).astype(o_ref.dtype)


def _round_up(v, m):
    return ((v + m - 1) // m) * m


def _vmem_estimate(x_bufs, out_bufs, w_bufs, rows, d_in, hidden, o_pad):
    """Rough VMEM bytes for one kernel instance (tiles + resident weights + temps)."""
    x_bytes = x_bufs * rows * d_in * 4                       # f32 x tiles
    out_bytes = out_bufs * rows * o_pad * 4                  # f32 out tiles
    w_bytes = w_bufs * (d_in * hidden * 2 + hidden * 4       # bf16 w1 + f32 b1
                        + hidden * o_pad * 2 + o_pad * 4)    # bf16 w2 + f32 b2
    interm = rows * hidden * (4 + 2) + 3 * rows * o_pad * 4  # h (f32+bf16), logits/e/out temps
    return x_bytes + out_bytes + w_bytes + interm


def _vmem_limit(estimate):
    # +30% headroom; never below the v6e default, never above v7x physical VMEM.
    return min(max(int(estimate * 1.3), 32 << 20), 64 << 20)


def prepare_params(w1, b1, w2, b2):
    """Pad/cast the parameters once (parameter-load time); reuse across calls.

    w1:(Din,H), b1:(H,) or (1,H), w2:(H,O), b2:(O,) or (1,O).
    Weights are stored pre-transposed (in, out) == nn.Linear's  x @ W^T.
    """
    d_in, hidden = w1.shape
    hidden2, n_classes = w2.shape
    assert hidden == hidden2

    # Lane-dense class axis: pad O up to a multiple of 128.
    o_pad = max(128, _round_up(n_classes, 128))
    w2_p = jnp.zeros((hidden, o_pad), jnp.bfloat16)
    w2_p = w2_p.at[:, :n_classes].set(w2.astype(jnp.bfloat16))
    b2_p = jnp.full((1, o_pad), _PAD_BIAS, jnp.float32)
    b2_p = b2_p.at[:, :n_classes].set(jnp.reshape(b2, (1, -1)).astype(jnp.float32))

    return {
        "w1": w1.astype(jnp.bfloat16),                 # bf16 MXU operand
        "b1": jnp.reshape(b1, (1, -1)).astype(jnp.float32),
        "w2": w2_p,                                    # bf16, class-padded
        "b2": b2_p,                                    # f32, -huge on padded cols
        "n_classes": n_classes,
    }


def mlp_classifier_from_params(x, params, *, block_b=512, slice_output=True):
    """x:(B,Din) f32 -> softmax probabilities (B,O) f32 (or (B,o_pad) if not sliced)."""
    B, d_in = x.shape
    w1, b1, w2, b2 = params["w1"], params["b1"], params["w2"], params["b2"]
    n_classes = params["n_classes"]
    hidden = w1.shape[1]
    o_pad = w2.shape[1]

    # x stays f32; the bf16 cast happens inside the kernel.
    x = x.astype(jnp.float32)

    gridless_est = _vmem_estimate(1, 1, 1, B, d_in, hidden, o_pad)
    use_gridless = (B <= min(block_b, _GRIDLESS_MAX_ROWS)
                    and int(gridless_est * 1.3) <= (48 << 20))  # v7x-safe (<64 MiB)

    if use_gridless:
        # Single-shot case: no grid, no pipeline machinery, whole-array VMEM blocks.
        vmem = pl.BlockSpec(memory_space=pltpu.MemorySpace.VMEM)
        out_p = pl.pallas_call(
            mlp_kernel,
            out_shape=jax.ShapeDtypeStruct((B, o_pad), jnp.float32),
            in_specs=[vmem, vmem, vmem, vmem, vmem],
            out_specs=vmem,
            compiler_params=pltpu.CompilerParams(
                vmem_limit_bytes=_vmem_limit(gridless_est)),
        )(x, w1, b1, w2, b2)
    else:
        # Batch-tiled path: tile ONLY the batch axis; weights stay VMEM-resident
        # across the grid. Ensure >=2 grid steps (v7x megacore) and 16-row
        # alignment (bf16 vregs pack [16,128]).
        eff_block = min(block_b, _round_up(max(1, (B + 1) // 2), 16))
        eff_block = max(16, eff_block)
        assert eff_block % 16 == 0
        grid = (pl.cdiv(B, eff_block),)
        tiled_est = _vmem_estimate(2, 2, 1, eff_block, d_in, hidden, o_pad)

        def weight_spec(shape, buffered):
            if buffered:
                # Constant index_map -> no benefit from double-buffering; keep a
                # single resident copy to halve the weights' VMEM footprint.
                return pl.BlockSpec(shape, lambda i: (0, 0),
                                    pipeline_mode=pl.Buffered(1))
            return pl.BlockSpec(shape, lambda i: (0, 0))

        def run(buffered_weights):
            grid_spec = pltpu.PrefetchScalarGridSpec(
                num_scalar_prefetch=0,
                grid=grid,
                in_specs=[
                    pl.BlockSpec((eff_block, d_in), lambda i: (i, 0)),
                    weight_spec((d_in, hidden), buffered_weights),
                    weight_spec((1, hidden), buffered_weights),
                    weight_spec((hidden, o_pad), buffered_weights),
                    weight_spec((1, o_pad), buffered_weights),
                ],
                out_specs=pl.BlockSpec((eff_block, o_pad), lambda i: (i, 0)),
            )
            return pl.pallas_call(
                mlp_kernel,
                out_shape=jax.ShapeDtypeStruct((B, o_pad), jnp.float32),
                grid_spec=grid_spec,
                compiler_params=pltpu.CompilerParams(
                    dimension_semantics=("parallel",),   # both TCs on v7x
                    vmem_limit_bytes=_vmem_limit(tiled_est),
                ),
            )(x, w1, b1, w2, b2)

        try:
            out_p = run(buffered_weights=True)
        except Exception:
            # Fallback if this JAX build rejects Buffered(1) on pallas_call specs.
            out_p = run(buffered_weights=False)

    if slice_output and n_classes != o_pad:
        # Cheap XLA slice; pass slice_output=False to keep the lane-dense padded
        # slab and let the consumer slice lazily (avoids an extra HBM pass).
        return out_p[:, :n_classes]
    return out_p


def mlp_classifier(x, w1, b1, w2, b2, **kwargs):
    """Convenience wrapper; prefer prepare_params() once + *_from_params for reuse."""
    return mlp_classifier_from_params(x, prepare_params(w1, b1, w2, b2), **kwargs)


def _reference(x, w1, b1, w2, b2):
    """Pure-JAX reference mirroring the kernel's bf16 MXU operand rounding."""
    xr = x.astype(jnp.bfloat16).astype(jnp.float32)
    w1r = w1.astype(jnp.bfloat16).astype(jnp.float32)
    w2r = w2.astype(jnp.bfloat16).astype(jnp.float32)
    h = jnp.maximum(xr @ w1r + b1, 0.0)
    h = h.astype(jnp.bfloat16).astype(jnp.float32)
    logits = h @ w2r + b2
    return jax.nn.softmax(logits, axis=1)


if __name__ == "__main__":
    # Small shapes consistent with the module: batch=8, input_dim=32,
    # hidden_dim=64, output_dim=16.
    B, D_IN, D_HID, D_OUT = 8, 32, 64, 16

    key = jax.random.PRNGKey(0)
    kx, k1, kb1, k2, kb2 = jax.random.split(key, 5)

    x = jax.random.normal(kx, (B, D_IN), dtype=jnp.float32)
    # nn.Linear-style uniform init, stored pre-transposed to (in, out).
    bound1 = 1.0 / (D_IN ** 0.5)
    w1 = jax.random.uniform(k1, (D_IN, D_HID), minval=-bound1, maxval=bound1,
                            dtype=jnp.float32)
    b1 = jax.random.uniform(kb1, (1, D_HID), minval=-bound1, maxval=bound1,
                            dtype=jnp.float32)
    bound2 = 1.0 / (D_HID ** 0.5)
    w2 = jax.random.uniform(k2, (D_HID, D_OUT), minval=-bound2, maxval=bound2,
                            dtype=jnp.float32)
    b2 = jax.random.uniform(kb2, (1, D_OUT), minval=-bound2, maxval=bound2,
                            dtype=jnp.float32)

    # Pad / cast the parameters ONCE (parameter-load time), reuse across calls.
    params = prepare_params(w1, b1, w2, b2)

    # ---- Path 1: small batch -> gridless kernel ----
    out = jax.block_until_ready(mlp_classifier_from_params(x, params))
    ref = _reference(x, w1, b1, w2, b2)
    assert out.shape == (B, D_OUT)
    assert jnp.allclose(out, ref, atol=2e-3, rtol=2e-3)          # bf16 MXU rounding
    assert jnp.allclose(jnp.sum(out, axis=1), 1.0, atol=1e-4)    # exact divide softmax

    # ---- Path 2: batch-tiled kernel (small block to exercise the grid) ----
    B2 = 64
    x2 = jax.random.normal(jax.random.PRNGKey(1), (B2, D_IN), dtype=jnp.float32)
    out2 = jax.block_until_ready(
        mlp_classifier_from_params(x2, params, block_b=16))
    ref2 = _reference(x2, w1, b1, w2, b2)
    assert out2.shape == (B2, D_OUT)
    assert jnp.allclose(out2, ref2, atol=2e-3, rtol=2e-3)
    assert jnp.allclose(jnp.sum(out2, axis=1), 1.0, atol=1e-4)

    print("KERNEL_OK")
</pallas_src>

<mosaic_0001>
module attributes {stable_mosaic.version = 11 : i64} {
  func.func @mlp_kernel(%arg0: memref<8x32xf32, #tpu.memory_space<vmem>>, %arg1: memref<32x64xbf16, #tpu.memory_space<vmem>>, %arg2: memref<1x64xf32, #tpu.memory_space<vmem>>, %arg3: memref<64x128xbf16, #tpu.memory_space<vmem>>, %arg4: memref<1x128xf32, #tpu.memory_space<vmem>>, %arg5: memref<8x128xf32, #tpu.memory_space<vmem>>) attributes {dimension_semantics = [], scalar_prefetch = 0 : i64, scratch_operands = 0 : i64, tpu.core_type = #tpu.core_type<tc>} {
    %c0 = arith.constant 0 : index
    %c0_0 = arith.constant 0 : index
    %0 = vector.load %arg0[%c0, %c0_0] : memref<8x32xf32, #tpu.memory_space<vmem>>, vector<8x32xf32>
    %1 = arith.truncf %0 : vector<8x32xf32> to vector<8x32xbf16>
    %c0_1 = arith.constant 0 : index
    %c0_2 = arith.constant 0 : index
    %2 = vector.load %arg1[%c0_1, %c0_2] : memref<32x64xbf16, #tpu.memory_space<vmem>>, vector<32x64xbf16>
    %cst = arith.constant dense<0.000000e+00> : vector<8x64xf32>
    %3 = tpu.matmul %1, %2, %cst {dimension_numbers = #tpu.dot_dimension_numbers<[1], [0], [0], [1], [0, 0, 1, 1], [], []>} : vector<8x32xbf16>, vector<32x64xbf16>, vector<8x64xf32> -> vector<8x64xf32>
    %c0_3 = arith.constant 0 : index
    %c0_4 = arith.constant 0 : index
    %4 = vector.load %arg2[%c0_3, %c0_4] : memref<1x64xf32, #tpu.memory_space<vmem>>, vector<1x64xf32>
    %5 = vector.broadcast %4 : vector<1x64xf32> to vector<8x64xf32>
    %6 = arith.addf %3, %5 : vector<8x64xf32>
    %cst_5 = arith.constant 0.000000e+00 : f32
    %7 = vector.broadcast %cst_5 : f32 to vector<8x64xf32>
    %8 = arith.maximumf %6, %7 : vector<8x64xf32>
    %9 = arith.truncf %8 : vector<8x64xf32> to vector<8x64xbf16>
    %c0_6 = arith.constant 0 : index
    %c0_7 = arith.constant 0 : index
    %10 = vector.load %arg3[%c0_6, %c0_7] : memref<64x128xbf16, #tpu.memory_space<vmem>>, vector<64x128xbf16>
    %cst_8 = arith.constant dense<0.000000e+00> : vector<8x128xf32>
    %11 = tpu.matmul %9, %10, %cst_8 {dimension_numbers = #tpu.dot_dimension_numbers<[1], [0], [0], [1], [0, 0, 1, 1], [], []>} : vector<8x64xbf16>, vector<64x128xbf16>, vector<8x128xf32> -> vector<8x128xf32>
    %c0_9 = arith.constant 0 : index
    %c0_10 = arith.constant 0 : index
    %12 = vector.load %arg4[%c0_9, %c0_10] : memref<1x128xf32, #tpu.memory_space<vmem>>, vector<1x128xf32>
    %13 = vector.broadcast %12 : vector<1x128xf32> to vector<8x128xf32>
    %14 = arith.addf %11, %13 : vector<8x128xf32>
    %cst_11 = arith.constant dense<0xFF800000> : vector<8xf32>
    %15 = vector.multi_reduction <maximumf>, %14, %cst_11 [1] : vector<8x128xf32> to vector<8xf32>
    %16 = vector.shape_cast %15 : vector<8xf32> to vector<8x1xf32>
    %17 = vector.broadcast %16 : vector<8x1xf32> to vector<8x128xf32>
    %18 = arith.subf %14, %17 : vector<8x128xf32>
    %19 = math.exp %18 : vector<8x128xf32>
    %cst_12 = arith.constant dense<0.000000e+00> : vector<8xf32>
    %20 = vector.multi_reduction <add>, %19, %cst_12 [1] : vector<8x128xf32> to vector<8xf32>
    %21 = vector.shape_cast %20 : vector<8xf32> to vector<8x1xf32>
    %22 = vector.broadcast %21 : vector<8x1xf32> to vector<8x128xf32>
    %23 = arith.divf %19, %22 : vector<8x128xf32>
    %c0_13 = arith.constant 0 : index
    %c0_14 = arith.constant 0 : index
    %24 = vector.load %arg5[%c0_13, %c0_14] : memref<8x128xf32, #tpu.memory_space<vmem>>, vector<8x128xf32>
    tpu.vector_store %arg5[%c0_13, %c0_14], %23 {strides = array<i32>} : memref<8x128xf32, #tpu.memory_space<vmem>>, vector<8x128xf32>,
    return
  }
}

</mosaic_0001>

<llo_original>
// kernel: tpu_custom_call.1
$region0: #{tpu_custom_call.1}
  #allocation0 [shape = 'u32[]', space=smem, size = 0x4, offset = 0x4, fixed_abs, tag = 'smem constant byte address 0x4 - core index']
  #allocation1 [shape = 'u32[144,128]{1,0:T(1,128)}', space=vmem, size = 0x12000, scoped, tag = 'internal scratch']
  %s0 = inlined_call_operand.hbm [shape: f32[8,32], index: 0, kind: input, shape index: {}]
  %s1 = inlined_call_operand.hbm [shape: bf16[32,64], index: 1, kind: input, shape index: {}]
  %s2 = inlined_call_operand.vmem [shape: f32[1,64], index: 2, kind: input, shape index: {}]
  %s3 = inlined_call_operand.hbm [shape: bf16[64,128], index: 3, kind: input, shape index: {}]
  %s4 = inlined_call_operand.vmem [shape: f32[1,128], index: 4, kind: input, shape index: {}]
  %s5 = inlined_call_operand.hbm [shape: f32[8,128], index: 5, kind: output, shape index: {}]
  %s6 = sld [smem:[#allocation0]]
  $region42: #{tpu_custom_call.1} parent=0
    _
  %s8 = ssub.s32 1, %s6
  %s9 = scalar_select 0, %s8, %s6
  $region1: #{tpu_custom_call.1} parent=0
    #allocation2 [shape = 'u8[4096]{0}', space=vmem, size = 0x1000, scoped, tag = 'input window, operand 0, single buffered']
    #allocation3 [shape = 's32[1]{0}', space=sflag, size = 0x4, scoped, tag = 'scoped memory for tpu_custom_call.1']
    #allocation4 [shape = 's32[1]{0}', space=sflag, size = 0x4, scoped, tag = 'scoped memory for tpu_custom_call.1']
    #allocation5 [shape = 'u8[8192]{0}', space=vmem, size = 0x2000, scoped, tag = 'input window, operand 1, single buffered']
    #allocation6 [shape = 's32[1]{0}', space=sflag, size = 0x4, scoped, tag = 'scoped memory for tpu_custom_call.1']
    #allocation7 [shape = 'u8[16384]{0}', space=vmem, size = 0x4000, scoped, tag = 'input window, operand 3, single buffered']
    #allocation8 [shape = 'u8[4096]{0}', space=vmem, size = 0x1000, scoped, tag = 'output window, operand 0, single buffered']
    %10 = vsyncpa [#allocation3], 0
    %11 = vsyncpa [#allocation6], 0
    %12 = vsyncpa [#allocation4], 0
    // Predicated region
    $region2: #{tpu_custom_call.1} parent=1 // pred_check
      _
    $region3: #{tpu_custom_call.1} parent=1 // pred_check_branch
      %14 = sbr.rel (0) target = $region5
    $region4: #{tpu_custom_call.1} parent=1 // pred_region
      %s16 = ssub.s32 128, 128
      %17 = vsyncadd [#allocation3], %s16
      %s19 = sshll.u32 [#allocation2], 4
      %s20 = int_to_ptr.vmem [resolvable:$true] %s19
      %22 = dma.hbm_to_vmem [thread:$0]  %s0, 128, %s20, [#allocation3]
    $region5: #{tpu_custom_call.1} parent=1 // pred_fallthru
      _
    // Predicated region
    $region6: #{tpu_custom_call.1} parent=1 // pred_check
      _
    $region7: #{tpu_custom_call.1} parent=1 // pred_check_branch
      %24 = sbr.rel (0) target = $region9
    $region8: #{tpu_custom_call.1} parent=1 // pred_region
      %s26 = ssub.s32 256, 256
      %27 = vsyncadd [#allocation6], %s26
      %s28 = sshll.u32 [#allocation5], 4
      %s29 = int_to_ptr.vmem [resolvable:$true] %s28
      %34 = dma.hbm_to_vmem [thread:$0]  %s1, 256, %s29, [#allocation6], 64, 64, 4
    $region9: #{tpu_custom_call.1} parent=1 // pred_fallthru
      _
    // Predicated region
    $region10: #{tpu_custom_call.1} parent=1 // pred_check
      _
    $region11: #{tpu_custom_call.1} parent=1 // pred_check_branch
      %36 = sbr.rel (0) target = $region13
    $region12: #{tpu_custom_call.1} parent=1 // pred_region
      _
    $region13: #{tpu_custom_call.1} parent=1 // pred_fallthru
      _
    // Predicated region
    $region14: #{tpu_custom_call.1} parent=1 // pred_check
      _
    $region15: #{tpu_custom_call.1} parent=1 // pred_check_branch
      %38 = sbr.rel (0) target = $region17
    $region16: #{tpu_custom_call.1} parent=1 // pred_region
      %s40 = ssub.s32 512, 512
      %41 = vsyncadd [#allocation6], %s40
      %s42 = sshll.u32 [#allocation7], 4
      %s43 = int_to_ptr.vmem [resolvable:$true] %s42
      %48 = dma.hbm_to_vmem [thread:$0]  %s3, 512, %s43, [#allocation6], 64, 64, 4
    $region17: #{tpu_custom_call.1} parent=1 // pred_fallthru
      _
    // Predicated region
    $region18: #{tpu_custom_call.1} parent=1 // pred_check
      _
    $region19: #{tpu_custom_call.1} parent=1 // pred_check_branch
      %50 = sbr.rel (0) target = $region21
    $region20: #{tpu_custom_call.1} parent=1 // pred_region
      _
    $region21: #{tpu_custom_call.1} parent=1 // pred_fallthru
      _
    // Predicated region
    $region22: #{tpu_custom_call.1} parent=1 // pred_check
      _
    $region23: #{tpu_custom_call.1} parent=1 // pred_check_branch
      %52 = sbr.rel (0) target = $region25
    $region24: #{tpu_custom_call.1} parent=1 // pred_region
      %53 = dma.done [#allocation3], 128
    $region25: #{tpu_custom_call.1} parent=1 // pred_fallthru
      _
    // Predicated region
    $region26: #{tpu_custom_call.1} parent=1 // pred_check
      _
    $region27: #{tpu_custom_call.1} parent=1 // pred_check_branch
      %55 = sbr.rel (0) target = $region29
    $region28: #{tpu_custom_call.1} parent=1 // pred_region
      %56 = dma.done [#allocation6], 256
    $region29: #{tpu_custom_call.1} parent=1 // pred_fallthru
      _
    // Predicated region
    $region30: #{tpu_custom_call.1} parent=1 // pred_check
      _
    $region31: #{tpu_custom_call.1} parent=1 // pred_check_branch
      %58 = sbr.rel (0) target = $region33
    $region32: #{tpu_custom_call.1} parent=1 // pred_region
      %59 = dma.done [#allocation6], 512
    $region33: #{tpu_custom_call.1} parent=1 // pred_fallthru
      _
    %v61 = vld [vmem:[#allocation2] sm:$0xff]
    %v62 = vpack.c.bf16 %v61, %v61
    %v63 = vld [vmem:[#allocation5] sm:$0xf]
    %v64 = vld [vmem:[#allocation5 + $0x4] sm:$0xf]
    %v65 = vld [vmem:[#allocation5 + $0x8] sm:$0xf]
    %v66 = vld [vmem:[#allocation5 + $0xc] sm:$0xf]
    %v67 = vld [vmem:[%s2] sm:$0x1]
    %v69 = vlaneseq
    %v70 = vshrl.u32 %v69, 7
    %v71 = vsub.s32 0, %v70
    %v72 = vrot.slane %v67, %v71
    %v78 = vunpack.c.l.b16 %v63
    %v79 = vunpack.c.l.b16 %v64
    %v80 = vunpack.c.l.b16 %v65
    %v81 = vunpack.c.l.b16 %v66
    %v82 = vpack.c.b16 %v79, %v78
    %v83 = vpack.c.b16 %v81, %v80
    %vm86 = vcmask 261120
    %v88 = vsel %vm86, %v62, 0
    %90 = vmatprep.subr.bf16.mxu0 0
    %91 = vmatpush1.bf16.msra.mxu0 %v82
    %92 = vmatprep.subr.bf16.mxu0 0
    %93 = vmatpush1.bf16.msra.mxu0 %v83
    %94 = vmatprep.subr.bf16.mxu0 0
    %95 = vmatpush1.bf16.msra.mxu0 0
    %96 = vmatprep.subr.bf16.mxu0 0
    %97 = vmatpush1.bf16.msra.mxu0 0
    %98 = vmatprep.subr.bf16.mxu0 0
    %99 = vmatpush1.bf16.msra.mxu0 0
    %100 = vmatprep.subr.bf16.mxu0 0
    %101 = vmatpush1.bf16.msra.mxu0 0
    %102 = vmatprep.subr.bf16.mxu0 0
    %103 = vmatpush1.bf16.msra.mxu0 0
    %104 = vmatprep.subr.bf16.mxu0 0
    %105 = vmatpush1.bf16.msra.mxu0 0
    %106 = vmatprep.subr.bf16.mxu0 0
    %107 = vmatpush1.bf16.msra.mxu0 0
    %108 = vmatprep.subr.bf16.mxu0 0
    %109 = vmatpush1.bf16.msra.mxu0 0
    %110 = vmatprep.subr.bf16.mxu0 0
    %111 = vmatpush1.bf16.msra.mxu0 0
    %112 = vmatprep.subr.bf16.mxu0 0
    %113 = vmatpush1.bf16.msra.mxu0 0
    %114 = vmatprep.subr.bf16.mxu0 0
    %115 = vmatpush1.bf16.msra.mxu0 0
    %116 = vmatprep.subr.bf16.mxu0 0
    %117 = vmatpush1.bf16.msra.mxu0 0
    %118 = vmatprep.subr.bf16.mxu0 0
    %119 = vmatpush1.bf16.msra.mxu0 0
    %120 = vmatprep.subr.bf16.mxu0 0
    %121 = vmatpush1.bf16.msra.mxu0 0
    %122 = vmatprep.mubr.bf16.mxu0 0
    %123 = vmatmul.mubr.bf16.gmra.mrb[0].mxu0 %v88
    %v124 = vpop.f32.mrb[0].mxu0
    %v125 = vadd.f32 %v72, %v124
    %v126 = vpop.f32.mrb[0].mxu0
    %v127 = vpop.f32.mrb[0].mxu0
    %v128 = vpop.f32.mrb[0].mxu0
    %129 = vdwg.mxu0
    %v130 = vmax.f32 %v125, 0.0
    %v131 = vpack.c.bf16 %v130, %v130
    %v132 = vld [vmem:[#allocation7] sm:$0xf]
    %v133 = vld [vmem:[#allocation7 + $0x4] sm:$0xf]
    %v134 = vld [vmem:[#allocation7 + $0x8] sm:$0xf]
    %v135 = vld [vmem:[#allocation7 + $0xc] sm:$0xf]
    %v136 = vld [vmem:[#allocation7 + $0x10] sm:$0xf]
    %v137 = vld [vmem:[#allocation7 + $0x14] sm:$0xf]
    %v138 = vld [vmem:[#allocation7 + $0x18] sm:$0xf]
    %v139 = vld [vmem:[#allocation7 + $0x1c] sm:$0xf]
    %v140 = vld [vmem:[%s4] sm:$0x1]
    %v142 = vlaneseq
    %v143 = vshrl.u32 %v142, 7
    %v144 = vsub.s32 0, %v143
    %v145 = vrot.slane %v140, %v144
    %v155 = vunpack.c.l.b16 %v132
    %v156 = vunpack.c.l.b16 %v133
    %v157 = vunpack.c.l.b16 %v134
    %v158 = vunpack.c.l.b16 %v135
    %v159 = vunpack.c.l.b16 %v136
    %v160 = vunpack.c.l.b16 %v137
    %v161 = vunpack.c.l.b16 %v138
    %v162 = vunpack.c.l.b16 %v139
    %v163 = vpack.c.b16 %v156, %v155
    %v164 = vpack.c.b16 %v158, %v157
    %v165 = vpack.c.b16 %v160, %v159
    %v166 = vpack.c.b16 %v162, %v161
    %vm171 = vcmask 523264
    %v173 = vsel %vm171, %v131, 0
    %175 = vmatprep.subr.bf16.mxu0 0
    %176 = vmatpush1.bf16.msra.mxu0 %v163
    %177 = vmatprep.subr.bf16.mxu0 0
    %178 = vmatpush1.bf16.msra.mxu0 %v164
    %179 = vmatprep.subr.bf16.mxu0 0
    %180 = vmatpush1.bf16.msra.mxu0 %v165
    %181 = vmatprep.subr.bf16.mxu0 0
    %182 = vmatpush1.bf16.msra.mxu0 %v166
    %183 = vmatprep.subr.bf16.mxu0 0
    %184 = vmatpush1.bf16.msra.mxu0 0
    %185 = vmatprep.subr.bf16.mxu0 0
    %186 = vmatpush1.bf16.msra.mxu0 0
    %187 = vmatprep.subr.bf16.mxu0 0
    %188 = vmatpush1.bf16.msra.mxu0 0
    %189 = vmatprep.subr.bf16.mxu0 0
    %190 = vmatpush1.bf16.msra.mxu0 0
    %191 = vmatprep.subr.bf16.mxu0 0
    %192 = vmatpush1.bf16.msra.mxu0 0
    %193 = vmatprep.subr.bf16.mxu0 0
    %194 = vmatpush1.bf16.msra.mxu0 0
    %195 = vmatprep.subr.bf16.mxu0 0
    %196 = vmatpush1.bf16.msra.mxu0 0
    %197 = vmatprep.subr.bf16.mxu0 0
    %198 = vmatpush1.bf16.msra.mxu0 0
    %199 = vmatprep.subr.bf16.mxu0 0
    %200 = vmatpush1.bf16.msra.mxu0 0
    %201 = vmatprep.subr.bf16.mxu0 0
    %202 = vmatpush1.bf16.msra.mxu0 0
    %203 = vmatprep.subr.bf16.mxu0 0
    %204 = vmatpush1.bf16.msra.mxu0 0
    %205 = vmatprep.subr.bf16.mxu0 0
    %206 = vmatpush1.bf16.msra.mxu0 0
    %207 = vmatprep.mubr.bf16.mxu0 0
    %208 = vmatmul.mubr.bf16.gmra.mrb[0].mxu0 %v173
    %v209 = vpop.f32.mrb[0].mxu0
    %v210 = vadd.f32 %v145, %v209
    %v211 = vpop.f32.mrb[0].mxu0
    %v212 = vpop.f32.mrb[0].mxu0
    %v213 = vpop.f32.mrb[0].mxu0
    %214 = vdwg.mxu0
    %215 = vmax.xlane.f32.xlu0 %v210
    %v216 = vpop.xlane.xlu0 %215
    %v217 = vsub.f32 %v210, %v216
    %v218 = vmul.f32 %v217, 1.442695
    %v219 = vpow.pop %v218
    %220 = vadd.xlane.f32.xlu0 %v219
    %v221 = vpop.xlane.xlu0 %220
    %v222 = vrcp.pop %v221
    %v223 = vmul.f32 %v219, %v222
    %224 = vst [vmem:[#allocation8] sm:$0xff] %v223
    // Predicated region
    $region34: #{tpu_custom_call.1} parent=1 // pred_check
      _
    $region35: #{tpu_custom_call.1} parent=1 // pred_check_branch
      %226 = sbr.rel (0) target = $region37
    $region36: #{tpu_custom_call.1} parent=1 // pred_region
      %s228 = ssub.s32 128, 128
      %229 = vsyncadd [#allocation4], %s228
      %s231 = sshll.u32 [#allocation8], 4
      %s232 = int_to_ptr.vmem [resolvable:$true] %s231
      %234 = dma.vmem_to_hbm [thread:$0]  %s232, 128, %s5, [#allocation4]
    $region37: #{tpu_custom_call.1} parent=1 // pred_fallthru
      _
    // Predicated region
    $region38: #{tpu_custom_call.1} parent=1 // pred_check
      _
    $region39: #{tpu_custom_call.1} parent=1 // pred_check_branch
      %236 = sbr.rel (0) target = $region41
    $region40: #{tpu_custom_call.1} parent=1 // pred_region
      %237 = dma.done [#allocation4], 128
    $region41: #{tpu_custom_call.1} parent=1 // pred_fallthru
      _
    %238 = vsyncpa [#allocation3], 1
    %239 = vsyncpa [#allocation6], 1
    %240 = vsyncpa [#allocation4], 1

</llo_original>
